<compile_context>
chip_gen: v7x
topology: tpu7x:2x2x1
jax: 0.10.0
libtpu: 0.0.40
codegen_flags: <defaults>
</compile_context>

<pallas_src>
import functools
import math

import jax
import jax.numpy as jnp
from jax.experimental import pallas as pl
from jax.experimental.pallas import tpu as pltpu

_LANE = 128
_EPS = 1e-4
# clip(sigmoid(x), eps, 1-eps) == sigmoid(clip(x, -L, +L)) with L = logit(1-eps)
_LOGIT_CLAMP = math.log((1.0 - _EPS) / _EPS)  # ~= 9.2102404
_FOLD = 32  # partial-sum sublanes per accumulator plane (4 independent vreg chains)


def _round_up(a, b):
    return ((a + b - 1) // b) * b


def _focal_loss_kernel(x_ref, t_ref, out_ref, *, tile_rows, fold, rows_total,
                       steps_per_slice):
    c = pl.program_id(0)
    i = pl.program_id(1)
    step = c * steps_per_slice + i  # logical (unclamped) row-block index

    @pl.when(i == 0)
    def _():
        out_ref[...] = jnp.zeros_like(out_ref)

    def accumulate(x, t):
        x = x.astype(jnp.float32)
        t = t.astype(jnp.float32)
        # Clamp the logit (monotone-equivalent to clamping the sigmoid) and reuse
        # log(sigmoid) for log(1-sigmoid) via the logit identity -> 2 EUP ops/elem.
        x_c = jnp.clip(x, -_LOGIT_CLAMP, _LOGIT_CLAMP)
        p = jax.nn.sigmoid(x_c)
        log_p = jnp.log(p)
        log_1mp = log_p - x_c               # log(1 - sigmoid(x)) = log(sigmoid(x)) - x
        omp = 1.0 - p
        u = 1.0 - t
        u2 = u * u
        neg_w = u2 * u2                     # (1 - t)^4 without pow

        pos_term = log_p * omp * omp
        neg_term = log_1mp * p * p * neg_w
        is_pos = t == 1.0
        # pos/neg contributions are mutually exclusive per element -> merge them
        # into a single accumulator plane. t > 1 (padding / garbage sentinel 2.0)
        # selects neither branch and contributes exactly zero.
        contrib = jnp.where(is_pos, pos_term, jnp.where(t < 1.0, neg_term, 0.0))
        pos_cnt = jnp.where(is_pos, 1.0, 0.0)

        def fold_sum(v):
            # (tile_rows, 128) -> (fold, 128): sublane-aligned leading-axis sum
            # => pure VPU adds with tile_rows/fold independent chains, no XLU.
            return jnp.sum(v.reshape(-1, fold, _LANE), axis=0)

        out_ref[0, 0, :, :] += fold_sum(contrib)
        out_ref[0, 1, :, :] += fold_sum(pos_cnt)

    # Only the block straddling the end of the data (or fully-out-of-range
    # excess steps) pays for masking; interior blocks run the lean path.
    is_tail = (step + 1) * tile_rows > rows_total

    @pl.when(jnp.logical_not(is_tail))
    def _():
        accumulate(x_ref[...], t_ref[...])

    @pl.when(is_tail)
    def _():
        rows_left = rows_total - step * tile_rows          # may be <= 0
        row_ids = jax.lax.broadcasted_iota(jnp.int32, (tile_rows, _LANE), 0)
        valid = row_ids < rows_left
        # Neutralize undefined block contents BEFORE sigmoid/log so no NaN/Inf
        # can be produced (t=2.0 -> zero contribution through the selects).
        x = jnp.where(valid, x_ref[...], 0.0)
        t = jnp.where(valid, t_ref[...], 2.0)
        accumulate(x, t)


@functools.partial(jax.jit, static_argnames=("tile_rows",))
def centernet_detection_loss(outputs, targets, *, tile_rows=2048):
    """outputs = raw logits, targets = heatmaps; same shape (B, C, H, W).
    f32 or bf16 inputs accepted; accumulation is always f32."""
    assert outputs.shape == targets.shape
    n = outputs.size

    # Lane-dense flat view. No full-array padding: only a <128-element tail pad
    # in the rare n % 128 != 0 case (targets padded with 2.0 -> zero contribution).
    x_flat = outputs.reshape(-1)
    t_flat = targets.reshape(-1)
    rows = pl.cdiv(n, _LANE)
    lane_pad = rows * _LANE - n
    if lane_pad:
        x_flat = jnp.pad(x_flat, (0, lane_pad))
        t_flat = jnp.pad(t_flat, (0, lane_pad), constant_values=2.0)
    x2 = x_flat.reshape(rows, _LANE)
    t2 = t_flat.reshape(rows, _LANE)

    # Tile rows: multiple of the fold depth, capped by the data; small inputs
    # fall back to a single full-extent block.
    if rows >= _FOLD:
        tr = max(_FOLD, min(_round_up(tile_rows, _FOLD), (rows // _FOLD) * _FOLD))
        fold = _FOLD
    else:
        tr = rows
        fold = rows
    steps_total = pl.cdiv(rows, tr)

    # v7x has 2 TensorCores, each with its own HBM path: shard the slice axis
    # across them. Single-TC chips (v5e/v6e) use one slice (no extra block switch).
    kind = jax.devices()[0].device_kind.lower()
    is_v7x = ("v7" in kind) or ("7x" in kind)
    if is_v7x and steps_total >= 2 and hasattr(pltpu, "CORE_PARALLEL"):
        num_slices = 2
        dims = (pltpu.CORE_PARALLEL, pltpu.ARBITRARY)
    else:
        num_slices = 1
        dims = ("parallel", "arbitrary")
    steps_per_slice = pl.cdiv(steps_total, num_slices)

    # Excess grid steps (num_slices*steps_per_slice > steps_total) re-read the
    # last block (clamped index); the kernel masks them via the logical step
    # index, so nothing is double counted.
    last_block = steps_total - 1
    if num_slices * steps_per_slice > steps_total:
        def row_map(c, i):
            return (jnp.minimum(c * steps_per_slice + i, last_block), 0)
    else:
        def row_map(c, i):
            return (c * steps_per_slice + i, 0)

    kernel = functools.partial(
        _focal_loss_kernel, tile_rows=tr, fold=fold, rows_total=rows,
        steps_per_slice=steps_per_slice)

    out_elems = num_slices * 2 * fold * _LANE
    cost = pl.CostEstimate(
        flops=18 * n,
        transcendentals=2 * n,  # sigmoid + log (log(1-p) derived via identity)
        bytes_accessed=int(x2.size * x2.dtype.itemsize
                           + t2.size * t2.dtype.itemsize
                           + out_elems * 4),
    )

    partials = pl.pallas_call(
        kernel,
        out_shape=jax.ShapeDtypeStruct((num_slices, 2, fold, _LANE), jnp.float32),
        grid_spec=pltpu.PrefetchScalarGridSpec(
            num_scalar_prefetch=0,
            grid=(num_slices, steps_per_slice),
            in_specs=[pl.BlockSpec((tr, _LANE), row_map),
                      pl.BlockSpec((tr, _LANE), row_map)],
            out_specs=pl.BlockSpec((1, 2, fold, _LANE), lambda c, i: (c, 0, 0, 0)),
        ),
        compiler_params=pltpu.CompilerParams(
            dimension_semantics=dims,
            vmem_limit_bytes=32 * 1024 * 1024,
        ),
        cost_estimate=cost,
    )(x2, t2)

    # Single final cross-lane/sublane reduction, outside the streaming loop.
    sums = jnp.sum(partials, axis=(0, 2, 3))  # (2,): [pos+neg loss, num_pos]
    total, num_pos = sums[0], sums[1]
    safe_den = jnp.where(num_pos == 0, 1.0, num_pos)
    # pos_sum == 0 whenever num_pos == 0, so -total == -neg_sum on that branch.
    return jnp.where(num_pos == 0, -total, -total / safe_den)


def _reference_loss(outputs, targets):
    """Faithful JAX port of the PyTorch module (clip-the-sigmoid formulation)."""
    out = jnp.clip(jax.nn.sigmoid(outputs.astype(jnp.float32)), _EPS, 1.0 - _EPS)
    t = targets.astype(jnp.float32)
    pos_inds = (t == 1.0).astype(jnp.float32)
    neg_inds = (t < 1.0).astype(jnp.float32)
    neg_weights = (1.0 - t) ** 4
    pos_loss = jnp.sum(jnp.log(out) * (1.0 - out) ** 2 * pos_inds)
    neg_loss = jnp.sum(jnp.log(1.0 - out) * out * out * neg_weights * neg_inds)
    num_pos = jnp.sum(pos_inds)
    safe_den = jnp.where(num_pos == 0, 1.0, num_pos)
    return jnp.where(num_pos == 0, -neg_loss, -(pos_loss + neg_loss) / safe_den)


if __name__ == "__main__":
    B, C, H, W = 2, 4, 16, 16
    key = jax.random.PRNGKey(0)
    k_out, k_tgt, k_pos = jax.random.split(key, 3)

    # raw logits (pre-sigmoid), as the module applies _sigmoid internally
    outputs = jax.random.normal(k_out, (B, C, H, W), dtype=jnp.float32)

    # CenterNet-style heatmap targets in [0, 1) with a few exact 1.0 peaks
    targets = jax.random.uniform(k_tgt, (B, C, H, W), dtype=jnp.float32, maxval=0.999)
    peak_mask = jax.random.uniform(k_pos, (B, C, H, W)) < 0.02
    targets = jnp.where(peak_mask, 1.0, targets)

    loss = jax.block_until_ready(centernet_detection_loss(outputs, targets))
    ref = jax.block_until_ready(_reference_loss(outputs, targets))
    assert jnp.allclose(loss, ref, rtol=1e-4, atol=1e-4), (loss, ref)

    # Ragged shape (exercises the in-kernel tail-masking path).
    k2o, k2t = jax.random.split(jax.random.PRNGKey(1))
    o2 = jax.random.normal(k2o, (1, 3, 56, 72), dtype=jnp.float32)
    t2 = jax.random.uniform(k2t, (1, 3, 56, 72), dtype=jnp.float32, maxval=0.999)
    t2 = t2.at[0, 1, 10, 20].set(1.0)
    l2 = jax.block_until_ready(centernet_detection_loss(o2, t2))
    r2 = jax.block_until_ready(_reference_loss(o2, t2))
    assert jnp.allclose(l2, r2, rtol=1e-4, atol=1e-4), (l2, r2)

    # num_pos == 0 branch.
    l3 = jax.block_until_ready(centernet_detection_loss(outputs, targets * 0.5))
    r3 = jax.block_until_ready(_reference_loss(outputs, targets * 0.5))
    assert jnp.allclose(l3, r3, rtol=1e-4, atol=1e-4), (l3, r3)

    # bf16 inputs accepted natively (reference sees the same upcast values).
    o4 = outputs.astype(jnp.bfloat16)
    t4 = targets.astype(jnp.bfloat16)
    l4 = jax.block_until_ready(centernet_detection_loss(o4, t4))
    r4 = jax.block_until_ready(
        _reference_loss(o4.astype(jnp.float32), t4.astype(jnp.float32)))
    assert jnp.allclose(l4, r4, rtol=1e-3, atol=1e-3), (l4, r4)

    print("KERNEL_OK")
</pallas_src>

<mosaic_0001>
module attributes {stable_mosaic.version = 11 : i64} {
  func.func @_focal_loss_kernel(%arg0: i32, %arg1: i32, %arg2: memref<16x128xf32, #tpu.memory_space<vmem>>, %arg3: memref<16x128xf32, #tpu.memory_space<vmem>>, %arg4: memref<1x2x16x128xf32, #tpu.memory_space<vmem>>) attributes {dimension_semantics = [#tpu.dimension_semantics<parallel>, #tpu.dimension_semantics<arbitrary>], iteration_bounds = array<i64: 1, 1>, scalar_prefetch = 0 : i64, scratch_operands = 0 : i64, tpu.core_type = #tpu.core_type<tc>, window_params = [{transform_indices = @transform_0, window_bounds = array<i64: 16, 128>}, {transform_indices = @transform_1, window_bounds = array<i64: 16, 128>}, {transform_indices = @transform_2, window_bounds = array<i64: 1, 2, 16, 128>}]} {
    %c1_i32 = arith.constant 1 : i32
    %0 = arith.muli %arg0, %c1_i32 : i32
    %1 = arith.addi %0, %arg1 : i32
    %c0_i32 = arith.constant 0 : i32
    %2 = arith.cmpi eq, %arg1, %c0_i32 : i32
    %3 = arith.extui %2 : i1 to i32
    %c0_i32_0 = arith.constant 0 : i32
    %4 = arith.cmpi ne, %3, %c0_i32_0 : i32
    scf.if %4 {
      %cst = arith.constant 0.000000e+00 : f32
      %13 = vector.broadcast %cst : f32 to vector<1x2x16x128xf32>
      %c0 = arith.constant 0 : index
      %c0_5 = arith.constant 0 : index
      %c0_6 = arith.constant 0 : index
      %c0_7 = arith.constant 0 : index
      %14 = vector.load %arg4[%c0, %c0_5, %c0_6, %c0_7] : memref<1x2x16x128xf32, #tpu.memory_space<vmem>>, vector<1x2x16x128xf32>
      tpu.vector_store %arg4[%c0, %c0_5, %c0_6, %c0_7], %13 {strides = array<i32>} : memref<1x2x16x128xf32, #tpu.memory_space<vmem>>, vector<1x2x16x128xf32>,
    } else {
    }
    %c1_i32_1 = arith.constant 1 : i32
    %5 = arith.addi %1, %c1_i32_1 : i32
    %c16_i32 = arith.constant 16 : i32
    %6 = arith.muli %5, %c16_i32 : i32
    %c16_i32_2 = arith.constant 16 : i32
    %7 = arith.cmpi sgt, %6, %c16_i32_2 : i32
    %true = arith.constant true
    %8 = arith.xori %7, %true : i1
    %9 = arith.extui %8 : i1 to i32
    %c0_i32_3 = arith.constant 0 : i32
    %10 = arith.cmpi ne, %9, %c0_i32_3 : i32
    scf.if %10 {
      %c0 = arith.constant 0 : index
      %c0_5 = arith.constant 0 : index
      %13 = vector.load %arg2[%c0, %c0_5] : memref<16x128xf32, #tpu.memory_space<vmem>>, vector<16x128xf32>
      %c0_6 = arith.constant 0 : index
      %c0_7 = arith.constant 0 : index
      %14 = vector.load %arg3[%c0_6, %c0_7] : memref<16x128xf32, #tpu.memory_space<vmem>>, vector<16x128xf32>
      %cst = arith.constant -9.210240e+00 : f32
      %cst_8 = arith.constant 9.210240e+00 : f32
      %15 = vector.broadcast %cst : f32 to vector<16x128xf32>
      %16 = arith.maximumf %15, %13 : vector<16x128xf32>
      %17 = vector.broadcast %cst_8 : f32 to vector<16x128xf32>
      %18 = arith.minimumf %17, %16 : vector<16x128xf32>
      %19 = arith.negf %18 : vector<16x128xf32>
      %20 = math.exp %19 : vector<16x128xf32>
      %cst_9 = arith.constant 1.000000e+00 : f32
      %21 = vector.broadcast %cst_9 : f32 to vector<16x128xf32>
      %22 = arith.addf %21, %20 : vector<16x128xf32>
      %23 = arith.divf %21, %22 : vector<16x128xf32>
      %24 = math.log %23 : vector<16x128xf32>
      %25 = arith.subf %24, %18 : vector<16x128xf32>
      %cst_10 = arith.constant 1.000000e+00 : f32
      %26 = vector.broadcast %cst_10 : f32 to vector<16x128xf32>
      %27 = arith.subf %26, %23 : vector<16x128xf32>
      %cst_11 = arith.constant 1.000000e+00 : f32
      %28 = vector.broadcast %cst_11 : f32 to vector<16x128xf32>
      %29 = arith.subf %28, %14 : vector<16x128xf32>
      %30 = arith.mulf %29, %29 : vector<16x128xf32>
      %31 = arith.mulf %30, %30 : vector<16x128xf32>
      %32 = arith.mulf %24, %27 : vector<16x128xf32>
      %33 = arith.mulf %32, %27 : vector<16x128xf32>
      %34 = arith.mulf %25, %23 : vector<16x128xf32>
      %35 = arith.mulf %34, %23 : vector<16x128xf32>
      %36 = arith.mulf %35, %31 : vector<16x128xf32>
      %cst_12 = arith.constant 1.000000e+00 : f32
      %37 = vector.broadcast %cst_12 : f32 to vector<16x128xf32>
      %38 = arith.cmpf oeq, %14, %37 : vector<16x128xf32>
      %cst_13 = arith.constant 1.000000e+00 : f32
      %39 = vector.broadcast %cst_13 : f32 to vector<16x128xf32>
      %40 = arith.cmpf olt, %14, %39 : vector<16x128xf32>
      %cst_14 = arith.constant 0.000000e+00 : f32
      %41 = vector.broadcast %cst_14 : f32 to vector<16x128xf32>
      %42 = arith.select %40, %36, %41 : vector<16x128xi1>, vector<16x128xf32>
      %43 = arith.select %38, %33, %42 : vector<16x128xi1>, vector<16x128xf32>
      %cst_15 = arith.constant 1.000000e+00 : f32
      %cst_16 = arith.constant 0.000000e+00 : f32
      %44 = vector.broadcast %cst_15 : f32 to vector<16x128xf32>
      %45 = vector.broadcast %cst_16 : f32 to vector<16x128xf32>
      %46 = arith.select %38, %44, %45 : vector<16x128xi1>, vector<16x128xf32>
      %c0_17 = arith.constant 0 : index
      %c0_18 = arith.constant 0 : index
      %c0_19 = arith.constant 0 : index
      %c0_20 = arith.constant 0 : index
      %47 = vector.load %arg4[%c0_17, %c0_18, %c0_19, %c0_20] : memref<1x2x16x128xf32, #tpu.memory_space<vmem>>, vector<1x1x16x128xf32>
      %48 = vector.shape_cast %47 : vector<1x1x16x128xf32> to vector<16x128xf32>
      %49 = vector.shape_cast %43 : vector<16x128xf32> to vector<1x16x128xf32>
      %cst_21 = arith.constant dense<0.000000e+00> : vector<16x128xf32>
      %50 = vector.multi_reduction <add>, %49, %cst_21 [0] : vector<1x16x128xf32> to vector<16x128xf32>
      %51 = arith.addf %48, %50 : vector<16x128xf32>
      %c0_22 = arith.constant 0 : index
      %c0_23 = arith.constant 0 : index
      %c0_24 = arith.constant 0 : index
      %c0_25 = arith.constant 0 : index
      %52 = vector.load %arg4[%c0_22, %c0_23, %c0_24, %c0_25] : memref<1x2x16x128xf32, #tpu.memory_space<vmem>>, vector<1x1x16x128xf32>
      %53 = vector.shape_cast %52 : vector<1x1x16x128xf32> to vector<16x128xf32>
      %54 = vector.shape_cast %51 : vector<16x128xf32> to vector<1x1x16x128xf32>
      tpu.vector_store %arg4[%c0_22, %c0_23, %c0_24, %c0_25], %54 {strides = array<i32>} : memref<1x2x16x128xf32, #tpu.memory_space<vmem>>, vector<1x1x16x128xf32>,
      %c0_26 = arith.constant 0 : index
      %c1 = arith.constant 1 : index
      %c0_27 = arith.constant 0 : index
      %c0_28 = arith.constant 0 : index
      %55 = vector.load %arg4[%c0_26, %c1, %c0_27, %c0_28] : memref<1x2x16x128xf32, #tpu.memory_space<vmem>>, vector<1x1x16x128xf32>
      %56 = vector.shape_cast %55 : vector<1x1x16x128xf32> to vector<16x128xf32>
      %57 = vector.shape_cast %46 : vector<16x128xf32> to vector<1x16x128xf32>
      %cst_29 = arith.constant dense<0.000000e+00> : vector<16x128xf32>
      %58 = vector.multi_reduction <add>, %57, %cst_29 [0] : vector<1x16x128xf32> to vector<16x128xf32>
      %59 = arith.addf %56, %58 : vector<16x128xf32>
      %c0_30 = arith.constant 0 : index
      %c1_31 = arith.constant 1 : index
      %c0_32 = arith.constant 0 : index
      %c0_33 = arith.constant 0 : index
      %60 = vector.load %arg4[%c0_30, %c1_31, %c0_32, %c0_33] : memref<1x2x16x128xf32, #tpu.memory_space<vmem>>, vector<1x1x16x128xf32>
      %61 = vector.shape_cast %60 : vector<1x1x16x128xf32> to vector<16x128xf32>
      %62 = vector.shape_cast %59 : vector<16x128xf32> to vector<1x1x16x128xf32>
      tpu.vector_store %arg4[%c0_30, %c1_31, %c0_32, %c0_33], %62 {strides = array<i32>} : memref<1x2x16x128xf32, #tpu.memory_space<vmem>>, vector<1x1x16x128xf32>,
    } else {
    }
    %11 = arith.extui %7 : i1 to i32
    %c0_i32_4 = arith.constant 0 : i32
    %12 = arith.cmpi ne, %11, %c0_i32_4 : i32
    scf.if %12 {
      %c16_i32_5 = arith.constant 16 : i32
      %13 = arith.muli %1, %c16_i32_5 : i32
      %c16_i32_6 = arith.constant 16 : i32
      %14 = arith.subi %c16_i32_6, %13 : i32
      %15 = tpu.iota {dimensions = array<i32: 0>} : vector<16x128xi32>
      %16 = vector.broadcast %14 : i32 to vector<16x128xi32>
      %17 = arith.cmpi slt, %15, %16 : vector<16x128xi32>
      %c0 = arith.constant 0 : index
      %c0_7 = arith.constant 0 : index
      %18 = vector.load %arg2[%c0, %c0_7] : memref<16x128xf32, #tpu.memory_space<vmem>>, vector<16x128xf32>
      %cst = arith.constant 0.000000e+00 : f32
      %19 = vector.broadcast %cst : f32 to vector<16x128xf32>
      %20 = arith.select %17, %18, %19 : vector<16x128xi1>, vector<16x128xf32>
      %c0_8 = arith.constant 0 : index
      %c0_9 = arith.constant 0 : index
      %21 = vector.load %arg3[%c0_8, %c0_9] : memref<16x128xf32, #tpu.memory_space<vmem>>, vector<16x128xf32>
      %cst_10 = arith.constant 2.000000e+00 : f32
      %22 = vector.broadcast %cst_10 : f32 to vector<16x128xf32>
      %23 = arith.select %17, %21, %22 : vector<16x128xi1>, vector<16x128xf32>
      %cst_11 = arith.constant -9.210240e+00 : f32
      %cst_12 = arith.constant 9.210240e+00 : f32
      %24 = vector.broadcast %cst_11 : f32 to vector<16x128xf32>
      %25 = arith.maximumf %24, %20 : vector<16x128xf32>
      %26 = vector.broadcast %cst_12 : f32 to vector<16x128xf32>
      %27 = arith.minimumf %26, %25 : vector<16x128xf32>
      %28 = arith.negf %27 : vector<16x128xf32>
      %29 = math.exp %28 : vector<16x128xf32>
      %cst_13 = arith.constant 1.000000e+00 : f32
      %30 = vector.broadcast %cst_13 : f32 to vector<16x128xf32>
      %31 = arith.addf %30, %29 : vector<16x128xf32>
      %32 = arith.divf %30, %31 : vector<16x128xf32>
      %33 = math.log %32 : vector<16x128xf32>
      %34 = arith.subf %33, %27 : vector<16x128xf32>
      %cst_14 = arith.constant 1.000000e+00 : f32
      %35 = vector.broadcast %cst_14 : f32 to vector<16x128xf32>
      %36 = arith.subf %35, %32 : vector<16x128xf32>
      %cst_15 = arith.constant 1.000000e+00 : f32
      %37 = vector.broadcast %cst_15 : f32 to vector<16x128xf32>
      %38 = arith.subf %37, %23 : vector<16x128xf32>
      %39 = arith.mulf %38, %38 : vector<16x128xf32>
      %40 = arith.mulf %39, %39 : vector<16x128xf32>
      %41 = arith.mulf %33, %36 : vector<16x128xf32>
      %42 = arith.mulf %41, %36 : vector<16x128xf32>
      %43 = arith.mulf %34, %32 : vector<16x128xf32>
      %44 = arith.mulf %43, %32 : vector<16x128xf32>
      %45 = arith.mulf %44, %40 : vector<16x128xf32>
      %cst_16 = arith.constant 1.000000e+00 : f32
      %46 = vector.broadcast %cst_16 : f32 to vector<16x128xf32>
      %47 = arith.cmpf oeq, %23, %46 : vector<16x128xf32>
      %cst_17 = arith.constant 1.000000e+00 : f32
      %48 = vector.broadcast %cst_17 : f32 to vector<16x128xf32>
      %49 = arith.cmpf olt, %23, %48 : vector<16x128xf32>
      %cst_18 = arith.constant 0.000000e+00 : f32
      %50 = vector.broadcast %cst_18 : f32 to vector<16x128xf32>
      %51 = arith.select %49, %45, %50 : vector<16x128xi1>, vector<16x128xf32>
      %52 = arith.select %47, %42, %51 : vector<16x128xi1>, vector<16x128xf32>
      %cst_19 = arith.constant 1.000000e+00 : f32
      %cst_20 = arith.constant 0.000000e+00 : f32
      %53 = vector.broadcast %cst_19 : f32 to vector<16x128xf32>
      %54 = vector.broadcast %cst_20 : f32 to vector<16x128xf32>
      %55 = arith.select %47, %53, %54 : vector<16x128xi1>, vector<16x128xf32>
      %c0_21 = arith.constant 0 : index
      %c0_22 = arith.constant 0 : index
      %c0_23 = arith.constant 0 : index
      %c0_24 = arith.constant 0 : index
      %56 = vector.load %arg4[%c0_21, %c0_22, %c0_23, %c0_24] : memref<1x2x16x128xf32, #tpu.memory_space<vmem>>, vector<1x1x16x128xf32>
      %57 = vector.shape_cast %56 : vector<1x1x16x128xf32> to vector<16x128xf32>
      %58 = vector.shape_cast %52 : vector<16x128xf32> to vector<1x16x128xf32>
      %cst_25 = arith.constant dense<0.000000e+00> : vector<16x128xf32>
      %59 = vector.multi_reduction <add>, %58, %cst_25 [0] : vector<1x16x128xf32> to vector<16x128xf32>
      %60 = arith.addf %57, %59 : vector<16x128xf32>
      %c0_26 = arith.constant 0 : index
      %c0_27 = arith.constant 0 : index
      %c0_28 = arith.constant 0 : index
      %c0_29 = arith.constant 0 : index
      %61 = vector.load %arg4[%c0_26, %c0_27, %c0_28, %c0_29] : memref<1x2x16x128xf32, #tpu.memory_space<vmem>>, vector<1x1x16x128xf32>
      %62 = vector.shape_cast %61 : vector<1x1x16x128xf32> to vector<16x128xf32>
      %63 = vector.shape_cast %60 : vector<16x128xf32> to vector<1x1x16x128xf32>
      tpu.vector_store %arg4[%c0_26, %c0_27, %c0_28, %c0_29], %63 {strides = array<i32>} : memref<1x2x16x128xf32, #tpu.memory_space<vmem>>, vector<1x1x16x128xf32>,
      %c0_30 = arith.constant 0 : index
      %c1 = arith.constant 1 : index
      %c0_31 = arith.constant 0 : index
      %c0_32 = arith.constant 0 : index
      %64 = vector.load %arg4[%c0_30, %c1, %c0_31, %c0_32] : memref<1x2x16x128xf32, #tpu.memory_space<vmem>>, vector<1x1x16x128xf32>
      %65 = vector.shape_cast %64 : vector<1x1x16x128xf32> to vector<16x128xf32>
      %66 = vector.shape_cast %55 : vector<16x128xf32> to vector<1x16x128xf32>
      %cst_33 = arith.constant dense<0.000000e+00> : vector<16x128xf32>
      %67 = vector.multi_reduction <add>, %66, %cst_33 [0] : vector<1x16x128xf32> to vector<16x128xf32>
      %68 = arith.addf %65, %67 : vector<16x128xf32>
      %c0_34 = arith.constant 0 : index
      %c1_35 = arith.constant 1 : index
      %c0_36 = arith.constant 0 : index
      %c0_37 = arith.constant 0 : index
      %69 = vector.load %arg4[%c0_34, %c1_35, %c0_36, %c0_37] : memref<1x2x16x128xf32, #tpu.memory_space<vmem>>, vector<1x1x16x128xf32>
      %70 = vector.shape_cast %69 : vector<1x1x16x128xf32> to vector<16x128xf32>
      %71 = vector.shape_cast %68 : vector<16x128xf32> to vector<1x1x16x128xf32>
      tpu.vector_store %arg4[%c0_34, %c1_35, %c0_36, %c0_37], %71 {strides = array<i32>} : memref<1x2x16x128xf32, #tpu.memory_space<vmem>>, vector<1x1x16x128xf32>,
    } else {
    }
    return
  }
  func.func @transform_0(%arg0: i32, %arg1: i32) -> (i32, i32) {
    %c1_i32 = arith.constant 1 : i32
    %0 = arith.muli %arg0, %c1_i32 : i32
    %1 = arith.addi %0, %arg1 : i32
    %c0_i32 = arith.constant 0 : i32
    %c0_i32_0 = arith.constant 0 : i32
    return %1, %c0_i32 : i32, i32
  }
  func.func @transform_1(%arg0: i32, %arg1: i32) -> (i32, i32) {
    %c1_i32 = arith.constant 1 : i32
    %0 = arith.muli %arg0, %c1_i32 : i32
    %1 = arith.addi %0, %arg1 : i32
    %c0_i32 = arith.constant 0 : i32
    %c0_i32_0 = arith.constant 0 : i32
    return %1, %c0_i32 : i32, i32
  }
  func.func @transform_2(%arg0: i32, %arg1: i32) -> (i32, i32, i32, i32) {
    %c0_i32 = arith.constant 0 : i32
    %c0_i32_0 = arith.constant 0 : i32
    %c0_i32_1 = arith.constant 0 : i32
    %c0_i32_2 = arith.constant 0 : i32
    return %arg0, %c0_i32, %c0_i32_0, %c0_i32_1 : i32, i32, i32, i32
  }
}

</mosaic_0001>

<llo_original>
// kernel: centernet_detection_loss.1
$region0: #{centernet_detection_loss.1}
  #allocation0 [shape = 'u32[]', space=smem, size = 0x4, offset = 0x4, fixed_abs, tag = 'smem constant byte address 0x4 - core index']
  #allocation1 [shape = 'u32[144,128]{1,0:T(1,128)}', space=vmem, size = 0x12000, scoped, tag = 'internal scratch']
  %s0 = inlined_call_operand.vmem [shape: f32[16,128], index: 0, kind: input, shape index: {}]
  %s1 = inlined_call_operand.vmem [shape: f32[16,128], index: 1, kind: input, shape index: {}]
  %s2 = inlined_call_operand.vmem [shape: f32[1,2,16,128], index: 2, kind: output, shape index: {}]
  %s3 = sld [smem:[#allocation0]]
  $region30: #{centernet_detection_loss.1} parent=0
    _
  %s5 = ssub.s32 1, %s3
  %s6 = scalar_select 0, %s5, %s3
  // Predicated region
  $region2: #{centernet_detection_loss.1} parent=0 // pred_check
    _
  $region3: #{centernet_detection_loss.1} parent=0 // pred_check_branch
    %8 = sbr.rel (0) target = $region5
  $region4: #{centernet_detection_loss.1} parent=0 // pred_region
    %s9 = sadd.s32 0, 0
    %s10 = smul.u32 2, %s9
    %p11 = scmp.lt.s32.totalorder %s10, 1
    %s12 = scalar_select %p11, %s10, 1
    %s13 = smul.addr %s12, 8
    %s14 = scalar_lea.vmem %s0, %s13
    %s15 = sadd.s32 0, 0
    %s16 = smul.u32 2, %s15
  $region5: #{centernet_detection_loss.1} parent=0 // pred_fallthru
    _
  // Predicated region
  $region6: #{centernet_detection_loss.1} parent=0 // pred_check
    _
  $region7: #{centernet_detection_loss.1} parent=0 // pred_check_branch
    %18 = sbr.rel (0) target = $region9
  $region8: #{centernet_detection_loss.1} parent=0 // pred_region
    %s19 = sadd.s32 0, 0
    %s20 = smul.u32 2, %s19
    %p21 = scmp.lt.s32.totalorder %s20, 1
    %s22 = scalar_select %p21, %s20, 1
    %s23 = smul.addr %s22, 8
    %s24 = scalar_lea.vmem %s1, %s23
    %s25 = sadd.s32 0, 0
    %s26 = smul.u32 2, %s25
  $region9: #{centernet_detection_loss.1} parent=0 // pred_fallthru
    _
  %s27 = sadd.s32 0, 0
  %s28 = smul.u32 2, %s27
  %p29 = scmp.lt.s32.totalorder %s28, 1
  %s30 = scalar_select %p29, %s28, 1
  %s31 = smul.addr %s30, 8
  %s32 = scalar_lea.vmem %s0, %s31
  %s33 = sadd.s32 0, 0
  %s34 = smul.u32 2, %s33
  %p35 = scmp.lt.s32.totalorder %s34, 1
  %s36 = scalar_select %p35, %s34, 1
  %s37 = smul.addr %s36, 8
  %s38 = scalar_lea.vmem %s1, %s37
  %s39 = sadd.s32 0, 0
  %s40 = smul.u32 2, %s39
  %p41 = scmp.lt.s32.totalorder %s40, 1
  %s42 = scalar_select %p41, %s40, 1
  %s43 = smul.addr %s42, 8
  %s44 = scalar_lea.vmem %s0, %s43
  %s45 = sadd.s32 0, 0
  %s46 = smul.u32 2, %s45
  %s47 = sadd.s32 0, 0
  %s48 = smul.u32 2, %s47
  %p49 = scmp.lt.s32.totalorder %s48, 1
  %s50 = scalar_select %p49, %s48, 1
  %s51 = smul.addr %s50, 8
  %s52 = scalar_lea.vmem %s1, %s51
  %s53 = sadd.s32 0, 0
  %s54 = smul.u32 2, %s53
  %s55 = sadd.s32 0, 0
  %p56 = scmp.eq.s32.totalorder 0, 0
  // Predicated region
  $region10: #{centernet_detection_loss.1} parent=0 // pred_check
    %p57 = pneg %p56
  $region11: #{centernet_detection_loss.1} parent=0 // pred_check_branch
    %59 = sbr.rel (%p57) target = $region13
  $region12: #{centernet_detection_loss.1} parent=0 // pred_region
    %60 = vst [vmem:[%s2] sm:$0xff] 0.0
    %61 = vst [vmem:[%s2 + $0x8] sm:$0xff] 0.0
    %62 = vst [vmem:[%s2 + $0x10] sm:$0xff] 0.0
    %63 = vst [vmem:[%s2 + $0x18] sm:$0xff] 0.0
  $region13: #{centernet_detection_loss.1} parent=0 // pred_fallthru
    _
  %s64 = sadd.s32 %s55, 1
  %s65 = smul.u32 %s64, 16
  %p66 = scmp.gt.s32.totalorder %s65, 16
  %p67 = scmp.le.s32.totalorder %s65, 16
  // Predicated region
  $region14: #{centernet_detection_loss.1} parent=0 // pred_check
    %p68 = pneg %p67
  $region15: #{centernet_detection_loss.1} parent=0 // pred_check_branch
    %70 = sbr.rel (%p68) target = $region17
  $region16: #{centernet_detection_loss.1} parent=0 // pred_region
    %v71 = vld [vmem:[%s44] sm:$0xff]
    %v72 = vld [vmem:[%s44 + $0x8] sm:$0xff]
    %v73 = vld [vmem:[%s52] sm:$0xff]
    %v74 = vld [vmem:[%s52 + $0x8] sm:$0xff]
    %v75 = vmax.f32 %v71, -9.21024
    %v76 = vmax.f32 %v72, -9.21024
    %v77 = vmin.f32 %v75, 9.21024
    %v78 = vmin.f32 %v76, 9.21024
    %v79 = vxor.u32 %v77, 2147483648
    %v80 = vxor.u32 %v78, 2147483648
    %v81 = vmul.f32 %v79, 1.442695
    %v82 = vpow.pop %v81
    %v83 = vmul.f32 %v80, 1.442695
    %v84 = vpow.pop %v83
    %v85 = vadd.f32 %v82, 1.0
    %v86 = vadd.f32 %v84, 1.0
    %v87 = vrcp.pop %v85
    %v88 = vmul.f32 1.0, %v87
    %v89 = vrcp.pop %v86
    %v90 = vmul.f32 1.0, %v89
    %v91 = vlog2.pop %v88
    %v92 = vmul.f32 %v91, 0.6931472
    %v93 = vlog2.pop %v90
    %v94 = vmul.f32 %v93, 0.6931472
    %v95 = vsub.f32 %v92, %v77
    %v96 = vsub.f32 %v94, %v78
    %v97 = vsub.f32 1.0, %v88
    %v98 = vsub.f32 1.0, %v90
    %v99 = vsub.f32 1.0, %v73
    %v100 = vsub.f32 1.0, %v74
    %v101 = vmul.f32 %v99, %v99
    %v102 = vmul.f32 %v100, %v100
    %v103 = vmul.f32 %v101, %v101
    %v104 = vmul.f32 %v102, %v102
    %v105 = vmul.f32 %v92, %v97
    %v106 = vmul.f32 %v94, %v98
    %v107 = vmul.f32 %v105, %v97
    %v108 = vmul.f32 %v106, %v98
    %v109 = vmul.f32 %v95, %v88
    %v110 = vmul.f32 %v96, %v90
    %v111 = vmul.f32 %v109, %v88
    %v112 = vmul.f32 %v110, %v90
    %v113 = vmul.f32 %v111, %v103
    %v114 = vmul.f32 %v112, %v104
    %vm115 = vcmp.eq.f32.partialorder %v73, 1.0
    %vm116 = vcmp.eq.f32.partialorder %v74, 1.0
    %vm117 = vcmp.lt.f32.partialorder %v73, 1.0
    %vm118 = vcmp.lt.f32.partialorder %v74, 1.0
    %v119 = vsel %vm117, %v113, 0.0
    %v120 = vsel %vm118, %v114, 0.0
    %v121 = vsel %vm115, %v107, %v119
    %v122 = vsel %vm116, %v108, %v120
    %v123 = vsel %vm115, 1.0, 0.0
    %v124 = vsel %vm116, 1.0, 0.0
    %v125 = vld [vmem:[%s2] sm:$0xff]
    %v126 = vld [vmem:[%s2 + $0x8] sm:$0xff]
    %v127 = vadd.f32 %v121, 0.0
    %v128 = vadd.f32 %v122, 0.0
    %v129 = vadd.f32 %v125, %v127
    %v130 = vadd.f32 %v126, %v128
    %131 = vst [vmem:[%s2] sm:$0xff] %v129
    %132 = vst [vmem:[%s2 + $0x8] sm:$0xff] %v130
    %s133 = scalar_lea.vmem %s2, 16
    %v134 = vld [vmem:[%s133] sm:$0xff]
    %v135 = vld [vmem:[%s133 + $0x8] sm:$0xff]
    %v136 = vadd.f32 %v123, 0.0
    %v137 = vadd.f32 %v124, 0.0
    %v138 = vadd.f32 %v134, %v136
    %v139 = vadd.f32 %v135, %v137
    %140 = vst [vmem:[%s133] sm:$0xff] %v138
    %141 = vst [vmem:[%s133 + $0x8] sm:$0xff] %v139
  $region17: #{centernet_detection_loss.1} parent=0 // pred_fallthru
    _
  // Predicated region
  $region18: #{centernet_detection_loss.1} parent=0 // pred_check
    %p142 = pneg %p66
  $region19: #{centernet_detection_loss.1} parent=0 // pred_check_branch
    %144 = sbr.rel (%p142) target = $region21
  $region20: #{centernet_detection_loss.1} parent=0 // pred_region
    %s145 = smul.u32 %s55, 16
    %s146 = ssub.s32 16, %s145
    %v147 = vlaneseq
    %v148 = vshrl.u32 %v147, 7
    %v149 = vadd.s32 %v148, 8
    %v150 = vstv %s146
    %vm151 = vcmp.lt.s32.totalorder %v148, %v150
    %vm152 = vcmp.lt.s32.totalorder %v149, %v150
    %v153 = vld [vmem:[%s44] sm:$0xff]
    %v154 = vld [vmem:[%s44 + $0x8] sm:$0xff]
    %v155 = vsel %vm151, %v153, 0.0
    %v156 = vsel %vm152, %v154, 0.0
    %v157 = vld [vmem:[%s52] sm:$0xff]
    %v158 = vld [vmem:[%s52 + $0x8] sm:$0xff]
    %v159 = vsel %vm151, %v157, 2.0
    %v160 = vsel %vm152, %v158, 2.0
    %v161 = vmax.f32 %v155, -9.21024
    %v162 = vmax.f32 %v156, -9.21024
    %v163 = vmin.f32 %v161, 9.21024
    %v164 = vmin.f32 %v162, 9.21024
    %v165 = vxor.u32 %v163, 2147483648
    %v166 = vxor.u32 %v164, 2147483648
    %v167 = vmul.f32 %v165, 1.442695
    %v168 = vpow.pop %v167
    %v169 = vmul.f32 %v166, 1.442695
    %v170 = vpow.pop %v169
    %v171 = vadd.f32 %v168, 1.0
    %v172 = vadd.f32 %v170, 1.0
    %v173 = vrcp.pop %v171
    %v174 = vmul.f32 1.0, %v173
    %v175 = vrcp.pop %v172
    %v176 = vmul.f32 1.0, %v175
    %v177 = vlog2.pop %v174
    %v178 = vmul.f32 %v177, 0.6931472
    %v179 = vlog2.pop %v176
    %v180 = vmul.f32 %v179, 0.6931472
    %v181 = vsub.f32 %v178, %v163
    %v182 = vsub.f32 %v180, %v164
    %v183 = vsub.f32 1.0, %v174
    %v184 = vsub.f32 1.0, %v176
    %v185 = vsub.f32 1.0, %v159
    %v186 = vsub.f32 1.0, %v160
    %v187 = vmul.f32 %v185, %v185
    %v188 = vmul.f32 %v186, %v186
    %v189 = vmul.f32 %v187, %v187
    %v190 = vmul.f32 %v188, %v188
    %v191 = vmul.f32 %v178, %v183
    %v192 = vmul.f32 %v180, %v184
    %v193 = vmul.f32 %v191, %v183
    %v194 = vmul.f32 %v192, %v184
    %v195 = vmul.f32 %v181, %v174
    %v196 = vmul.f32 %v182, %v176
    %v197 = vmul.f32 %v195, %v174
    %v198 = vmul.f32 %v196, %v176
    %v199 = vmul.f32 %v197, %v189
    %v200 = vmul.f32 %v198, %v190
    %vm201 = vcmp.eq.f32.partialorder %v159, 1.0
    %vm202 = vcmp.eq.f32.partialorder %v160, 1.0
    %vm203 = vcmp.lt.f32.partialorder %v159, 1.0
    %vm204 = vcmp.lt.f32.partialorder %v160, 1.0
    %v205 = vsel %vm203, %v199, 0.0
    %v206 = vsel %vm204, %v200, 0.0
    %v207 = vsel %vm201, %v193, %v205
    %v208 = vsel %vm202, %v194, %v206
    %v209 = vsel %vm201, 1.0, 0.0
    %v210 = vsel %vm202, 1.0, 0.0
    %v211 = vld [vmem:[%s2] sm:$0xff]
    %v212 = vld [vmem:[%s2 + $0x8] sm:$0xff]
    %v213 = vadd.f32 %v207, 0.0
    %v214 = vadd.f32 %v208, 0.0
    %v215 = vadd.f32 %v211, %v213
    %v216 = vadd.f32 %v212, %v214
    %217 = vst [vmem:[%s2] sm:$0xff] %v215
    %218 = vst [vmem:[%s2 + $0x8] sm:$0xff] %v216
    %s219 = scalar_lea.vmem %s2, 16
    %v220 = vld [vmem:[%s219] sm:$0xff]
    %v221 = vld [vmem:[%s219 + $0x8] sm:$0xff]
    %v222 = vadd.f32 %v209, 0.0
    %v223 = vadd.f32 %v210, 0.0
    %v224 = vadd.f32 %v220, %v222
    %v225 = vadd.f32 %v221, %v223
    %226 = vst [vmem:[%s219] sm:$0xff] %v224
    %227 = vst [vmem:[%s219 + $0x8] sm:$0xff] %v225
  $region21: #{centernet_detection_loss.1} parent=0 // pred_fallthru
    _
  // Predicated region
  $region22: #{centernet_detection_loss.1} parent=0 // pred_check
    _
  $region23: #{centernet_detection_loss.1} parent=0 // pred_check_branch
    %229 = sbr.rel (0) target = $region25
  $region24: #{centernet_detection_loss.1} parent=0 // pred_region
    _
  $region25: #{centernet_detection_loss.1} parent=0 // pred_fallthru
    _
  // Predicated region
  $region26: #{centernet_detection_loss.1} parent=0 // pred_check
    _
  $region27: #{centernet_detection_loss.1} parent=0 // pred_check_branch
    %231 = sbr.rel (0) target = $region29
  $region28: #{centernet_detection_loss.1} parent=0 // pred_region
    _
  $region29: #{centernet_detection_loss.1} parent=0 // pred_fallthru
    _

</llo_original>
